<compile_context>
chip_gen: v7x
topology: tpu7x:2x2x1
jax: 0.10.0
libtpu: 0.0.40
codegen_flags: <defaults>
</compile_context>

<pallas_src>
from functools import partial

import jax
import jax.numpy as jnp
from jax.experimental import pallas as pl
from jax.experimental.pallas import tpu as pltpu


LANES = 1024                    # lane-dense output rows (8 vregs wide)
SMALL_TENSOR_BYTES = 1 << 20    # below this, plain jnp fuses better


# ---------------------------------------------------------------------------
# TPU-generation dependent tiling plan.
# ---------------------------------------------------------------------------
def _tpu_config():
    kind = ""
    try:
        dev = jax.devices()[0]
        if dev.platform == "tpu":
            kind = dev.device_kind.lower()
    except Exception:  # pragma: no cover - defensive; fall back to defaults
        pass
    if "v7" in kind or "tpu7" in kind:
        # 2 TCs -> keep >= 8 grid steps; 8 MiB blocks need a raised scoped limit.
        return {"vmem_budget": 32 << 20, "min_grid": 8, "vmem_limit": 40 << 20}
    if "v6" in kind:
        return {"vmem_budget": 16 << 20, "min_grid": 4, "vmem_limit": None}
    if "v5" in kind:
        return {"vmem_budget": 8 << 20, "min_grid": 4, "vmem_limit": None}
    # Unknown chip / interpret mode: conservative defaults that fit everywhere.
    return {"vmem_budget": 8 << 20, "min_grid": 4, "vmem_limit": None}


def _plan_blocks(rows, itemsize, num_streams):
    """Pick (block_rows, grid, vmem_limit) for a lane-dense (rows, 1024) stream."""
    cfg = _tpu_config()
    row_align = max(8, 32 // itemsize)          # 8 (f32), 16 (bf16), 32 (int8)
    # Budget covers num_streams arrays, each double-buffered.
    max_block_bytes = cfg["vmem_budget"] // (2 * num_streams)
    max_block_rows = max(
        row_align,
        (max_block_bytes // (LANES * itemsize)) // row_align * row_align,
    )
    # Keep >= min_grid steps when the tensor is big enough (double-buffer
    # overlap on single-TC chips, megacore split on v7x).
    target_rows = -(-rows // cfg["min_grid"])                   # cdiv
    target_rows = -(-target_rows // row_align) * row_align      # align up
    block_rows = max(row_align, min(max_block_rows, target_rows))
    if rows < block_rows:
        block_rows = rows            # full-dim block: always a legal block shape
    grid = (pl.cdiv(rows, block_rows),)
    return block_rows, grid, cfg["vmem_limit"]


def _lane_dense_call(kernel, operands_2d, out_dtype, bulk_rows, itemsize, *,
                     num_streams, flops_per_elem, trans_per_elem, aliases=None):
    """Run `kernel` over lane-dense (bulk_rows, 1024) operands, streaming tiles."""
    block_rows, grid, vmem_limit = _plan_blocks(bulk_rows, itemsize, num_streams)
    spec = pl.BlockSpec((block_rows, LANES), lambda i: (i, 0))
    n_elems = bulk_rows * LANES
    return pl.pallas_call(
        kernel,
        out_shape=jax.ShapeDtypeStruct((bulk_rows, LANES), out_dtype),
        grid_spec=pltpu.PrefetchScalarGridSpec(
            num_scalar_prefetch=0,
            grid=grid,
            in_specs=[spec] * len(operands_2d),
            out_specs=spec,
        ),
        compiler_params=pltpu.CompilerParams(
            dimension_semantics=("parallel",),
            vmem_limit_bytes=vmem_limit,
        ),
        cost_estimate=pl.CostEstimate(
            flops=flops_per_elem * n_elems,
            transcendentals=trans_per_elem * n_elems,
            bytes_accessed=num_streams * n_elems * itemsize,
        ),
        input_output_aliases=aliases or {},
    )(*operands_2d)


# ---------------------------------------------------------------------------
# Forward kernel: elementwise ReLU on one VMEM tile (pure VPU / DMA-bound).
# ---------------------------------------------------------------------------
def _gmodrelu_fwd_kernel(x_ref, o_ref):
    o_ref[...] = jnp.maximum(x_ref[...], 0)


def _relu_pallas(x, donate_input=False, force_pallas=False):
    """Elementwise ReLU via a lane-dense, double-buffered streaming Pallas kernel."""
    orig_shape = x.shape
    dtype = x.dtype
    n = x.size
    if n == 0:
        return x
    itemsize = jnp.dtype(dtype).itemsize

    # Small-tensor fast path: pallas_call launch cost dominates and jnp fuses
    # into the producer/consumer, avoiding the extra HBM round trip entirely.
    if (not force_pallas and n * itemsize < SMALL_TENSOR_BYTES) or n < LANES:
        return jnp.maximum(x, 0)

    # TODO(synk): for NCHW activations with small trailing dims, confirm in the
    # compiled HLO that this flatten/reshape lowers to a bitcast, not a relayout
    # copy; if copies appear, tile the original N-D shape instead.
    x_flat = x.reshape(-1)
    bulk_rows = n // LANES
    bulk = bulk_rows * LANES
    x2d = (x_flat if bulk == n else x_flat[:bulk]).reshape(bulk_rows, LANES)

    # ReLU is safely in-place; only alias when no tail slicing defeats it.
    aliases = {0: 0} if (donate_input and bulk == n) else None

    out2d = _lane_dense_call(
        _gmodrelu_fwd_kernel, [x2d], dtype, bulk_rows, itemsize,
        num_streams=2, flops_per_elem=1, trans_per_elem=0, aliases=aliases)

    out_flat = out2d.reshape(-1)
    if bulk != n:
        # Ragged tail (< 1024 elements): cheap jnp epilogue, no full-tensor pad.
        out_flat = jnp.concatenate([out_flat, jnp.maximum(x_flat[bulk:], 0)])
    return out_flat.reshape(orig_shape)


# ---------------------------------------------------------------------------
# Backward: GModReLUFunction.backward (hyperbolic-kernel gradient shaping),
# as a fused single-pass Pallas kernel + pure-jnp reference / fallback.
# ---------------------------------------------------------------------------
def _gmodrelu_bwd_ref(x, g, l, k, kernel_type):
    positive_mask = (x > 0).astype(g.dtype)
    if l == 0 or k == 0:
        kernel = jnp.zeros_like(x)
    elif "nonscale" in kernel_type:
        kernel = l / (1 + jnp.abs(x) / (l * k))
    else:
        kernel = l / (1 + jnp.abs(x * g) / (l * k))
    if "clip" in kernel_type:
        kernel = kernel * (x < 0).astype(g.dtype)
    if "fixed" in kernel_type:
        return (positive_mask - jnp.sign(x) * kernel) * g
    return jnp.where(g > 0, positive_mask,
                     positive_mask - jnp.sign(x) * kernel) * g


def _make_bwd_kernel(l, k, kernel_type):
    use_kernel = not (l == 0 or k == 0)
    nonscale = "nonscale" in kernel_type
    clip = "clip" in kernel_type
    fixed = "fixed" in kernel_type
    inv_lk = (1.0 / (l * k)) if use_kernel else 0.0

    def bwd_kernel(x_ref, g_ref, o_ref):
        xf = x_ref[...].astype(jnp.float32)
        gf = g_ref[...].astype(jnp.float32)
        pos = (xf > 0).astype(jnp.float32)
        if use_kernel:
            arg = jnp.abs(xf) if nonscale else jnp.abs(xf * gf)
            # l / (1 + |.|/(l*k)); approximate reciprocal lands on the EUP slot,
            # essentially free under the HBM/DMA bound.
            kern = l * pl.reciprocal(1.0 + arg * inv_lk, approx=True)
        else:
            kern = jnp.zeros_like(xf)
        if clip:
            kern = kern * (xf < 0).astype(jnp.float32)
        shaped = pos - jnp.sign(xf) * kern
        grad = (shaped * gf) if fixed else (jnp.where(gf > 0, pos, shaped) * gf)
        o_ref[...] = grad.astype(o_ref.dtype)

    return bwd_kernel


def _gmodrelu_bwd_impl(x, g, l, k, kernel_type, force_pallas=False):
    dtype = x.dtype
    n = x.size
    if n == 0:
        return jnp.zeros_like(x)
    itemsize = jnp.dtype(dtype).itemsize
    if (not force_pallas and n * itemsize < SMALL_TENSOR_BYTES) or n < LANES:
        return _gmodrelu_bwd_ref(x, g, l, k, kernel_type).astype(dtype)

    x_flat = x.reshape(-1)
    g_flat = g.reshape(-1)
    bulk_rows = n // LANES
    bulk = bulk_rows * LANES
    x2d = (x_flat if bulk == n else x_flat[:bulk]).reshape(bulk_rows, LANES)
    g2d = (g_flat if bulk == n else g_flat[:bulk]).reshape(bulk_rows, LANES)

    kernel = _make_bwd_kernel(float(l), float(k), kernel_type)
    out2d = _lane_dense_call(
        kernel, [x2d, g2d], dtype, bulk_rows, itemsize,
        num_streams=3, flops_per_elem=8, trans_per_elem=1)

    out_flat = out2d.reshape(-1)
    if bulk != n:
        tail = _gmodrelu_bwd_ref(x_flat[bulk:], g_flat[bulk:], l, k,
                                 kernel_type).astype(dtype)
        out_flat = jnp.concatenate([out_flat, tail])
    return out_flat.reshape(x.shape)


# ---------------------------------------------------------------------------
# Public forward (inference path) and custom-VJP wrapper (training parity with
# the PyTorch GModReLUFunction backward).
# ---------------------------------------------------------------------------
def gmodrelu_forward(x, l=0.1, k=5.5, kernel_type="standard",
                     donate_input=False, force_pallas=False):
    """Forward of GModReLU == ReLU(x); l/k/kernel_type only affect gradients."""
    del l, k, kernel_type  # forward-only parameters (backward shaping)
    return _relu_pallas(x, donate_input=donate_input, force_pallas=force_pallas)


@partial(jax.custom_vjp, nondiff_argnums=(1, 2, 3))
def gmodrelu(x, l=0.1, k=5.5, kernel_type="standard"):
    return _relu_pallas(x)


def _gmodrelu_vjp_fwd(x, l, k, kernel_type):
    return _relu_pallas(x), x


def _gmodrelu_vjp_bwd(l, k, kernel_type, x, g):
    return (_gmodrelu_bwd_impl(x, g, l, k, kernel_type),)


gmodrelu.defvjp(_gmodrelu_vjp_fwd, _gmodrelu_vjp_bwd)


if __name__ == "__main__":
    key = jax.random.PRNGKey(0)
    kx, kg, km, kr = jax.random.split(key, 4)

    # Primary small NCHW activation, consistent with typical module usage.
    x = jax.random.normal(kx, (2, 4, 16, 16), dtype=jnp.float32)
    y_ref = jnp.maximum(x, 0.0)

    # 1) Default path (small tensor -> fused jnp fast path).
    y_fast = jax.block_until_ready(gmodrelu_forward(x))
    assert jnp.allclose(y_fast, y_ref), "fast-path mismatch"

    # 2) Forward Pallas kernel forced on the small input (2048 elems = 2 lane rows).
    y_pallas = jax.block_until_ready(gmodrelu_forward(x, force_pallas=True))
    assert y_pallas.shape == x.shape and y_pallas.dtype == x.dtype
    assert jnp.allclose(y_pallas, y_ref), "pallas forward mismatch"

    # 3) Medium tensor (2 MiB): exercises the default Pallas path with real blocks.
    xm = jax.random.normal(km, (32, 16, 32, 32), dtype=jnp.float32)
    ym = jax.block_until_ready(gmodrelu_forward(xm))
    assert jnp.allclose(ym, jnp.maximum(xm, 0.0)), "medium-tensor mismatch"

    # 4) Ragged size: aligned bulk via Pallas, <1024-element tail via jnp.
    xr = jax.random.normal(kr, (3, 5, 7, 11), dtype=jnp.float32)  # 1155 elements
    yr = jax.block_until_ready(gmodrelu_forward(xr, force_pallas=True))
    assert jnp.allclose(yr, jnp.maximum(xr, 0.0)), "ragged-tail mismatch"

    # 5) custom-VJP backward shaping: grad_output == 1 -> positive mask exactly.
    g = jax.grad(lambda v: gmodrelu(v, 0.1, 5.5, "standard").sum())(x)
    jax.block_until_ready(g)
    assert g.shape == x.shape
    assert jnp.allclose(g, (x > 0).astype(x.dtype)), "custom vjp mismatch"

    # 6) Fused backward Pallas kernel vs jnp reference (mixed-sign grad_output).
    gm = jax.random.normal(kg, xm.shape, dtype=jnp.float32)
    bw_pallas = jax.block_until_ready(
        _gmodrelu_bwd_impl(xm, gm, 0.1, 5.5, "standard", force_pallas=True))
    bw_ref = _gmodrelu_bwd_ref(xm, gm, 0.1, 5.5, "standard")
    assert jnp.allclose(bw_pallas, bw_ref, rtol=1e-2, atol=1e-2), \
        "fused backward mismatch"

    # 7) In-place forward: output aliases the donated input HBM buffer.
    relu_inplace = jax.jit(
        lambda v: gmodrelu_forward(v, donate_input=True, force_pallas=True),
        donate_argnums=(0,))
    x_donated = x + 0.0  # fresh buffer we are allowed to donate
    y_inplace = jax.block_until_ready(relu_inplace(x_donated))
    assert jnp.allclose(y_inplace, y_ref), "in-place path mismatch"

    print("KERNEL_OK")
</pallas_src>

<mosaic_0001>
module attributes {stable_mosaic.version = 11 : i64} {
  func.func @_gmodrelu_fwd_kernel(%arg0: i32, %arg1: memref<2x1024xf32, #tpu.memory_space<vmem>>, %arg2: memref<2x1024xf32, #tpu.memory_space<vmem>>) attributes {dimension_semantics = [#tpu.dimension_semantics<parallel>], iteration_bounds = array<i64: 1>, scalar_prefetch = 0 : i64, scratch_operands = 0 : i64, tpu.core_type = #tpu.core_type<tc>, window_params = [{transform_indices = @transform_0, window_bounds = array<i64: 2, 1024>}, {transform_indices = @transform_1, window_bounds = array<i64: 2, 1024>}]} {
    %c0 = arith.constant 0 : index
    %c0_0 = arith.constant 0 : index
    %0 = vector.load %arg1[%c0, %c0_0] : memref<2x1024xf32, #tpu.memory_space<vmem>>, vector<2x1024xf32>
    %cst = arith.constant 0.000000e+00 : f32
    %1 = vector.broadcast %cst : f32 to vector<2x1024xf32>
    %2 = arith.maximumf %0, %1 : vector<2x1024xf32>
    %c0_1 = arith.constant 0 : index
    %c0_2 = arith.constant 0 : index
    %3 = vector.load %arg2[%c0_1, %c0_2] : memref<2x1024xf32, #tpu.memory_space<vmem>>, vector<2x1024xf32>
    tpu.vector_store %arg2[%c0_1, %c0_2], %2 {strides = array<i32>} : memref<2x1024xf32, #tpu.memory_space<vmem>>, vector<2x1024xf32>,
    return
  }
  func.func @transform_0(%arg0: i32) -> (i32, i32) {
    %c0_i32 = arith.constant 0 : i32
    %c0_i32_0 = arith.constant 0 : i32
    return %arg0, %c0_i32 : i32, i32
  }
  func.func @transform_1(%arg0: i32) -> (i32, i32) {
    %c0_i32 = arith.constant 0 : i32
    %c0_i32_0 = arith.constant 0 : i32
    return %arg0, %c0_i32 : i32, i32
  }
}

</mosaic_0001>

<llo_original>
// kernel: tpu_custom_call.1
$region0: #{tpu_custom_call.1}
  #allocation0 [shape = 'u32[]', space=smem, size = 0x4, offset = 0x4, fixed_abs, tag = 'smem constant byte address 0x4 - core index']
  #allocation1 [shape = 'u32[144,128]{1,0:T(1,128)}', space=vmem, size = 0x12000, scoped, tag = 'internal scratch']
  %s0 = inlined_call_operand.hbm [shape: f32[2,1024], index: 0, kind: input, shape index: {}]
  %s1 = inlined_call_operand.hbm [shape: f32[2,1024], index: 1, kind: output, shape index: {}]
  %s2 = sld [smem:[#allocation0]]
  $region18: #{tpu_custom_call.1} parent=0
    _
  %s4 = ssub.s32 1, %s2
  %s5 = scalar_select 0, %s4, %s2
  $region1: #{tpu_custom_call.1} parent=0
    #allocation2 [shape = 'u8[8192]{0}', space=vmem, size = 0x2000, scoped, tag = 'input window, operand 0, single buffered']
    #allocation3 [shape = 's32[1]{0}', space=sflag, size = 0x4, scoped, tag = 'scoped memory for tpu_custom_call.1']
    #allocation4 [shape = 's32[1]{0}', space=sflag, size = 0x4, scoped, tag = 'scoped memory for tpu_custom_call.1']
    #allocation5 [shape = 'u8[8192]{0}', space=vmem, size = 0x2000, scoped, tag = 'output window, operand 0, single buffered']
    %6 = vsyncpa [#allocation3], 0
    %7 = vsyncpa [#allocation4], 0
    // Predicated region
    $region2: #{tpu_custom_call.1} parent=1 // pred_check
      _
    $region3: #{tpu_custom_call.1} parent=1 // pred_check_branch
      %9 = sbr.rel (0) target = $region5
    $region4: #{tpu_custom_call.1} parent=1 // pred_region
      %s11 = ssub.s32 256, 256
      %12 = vsyncadd [#allocation3], %s11
      %s14 = sshll.u32 [#allocation2], 4
      %s15 = int_to_ptr.vmem [resolvable:$true] %s14
      %17 = dma.hbm_to_vmem [thread:$0]  %s0, 256, %s15, [#allocation3]
    $region5: #{tpu_custom_call.1} parent=1 // pred_fallthru
      _
    // Predicated region
    $region6: #{tpu_custom_call.1} parent=1 // pred_check
      _
    $region7: #{tpu_custom_call.1} parent=1 // pred_check_branch
      %19 = sbr.rel (0) target = $region9
    $region8: #{tpu_custom_call.1} parent=1 // pred_region
      %20 = dma.done [#allocation3], 256
    $region9: #{tpu_custom_call.1} parent=1 // pred_fallthru
      _
    %v21 = vld [vmem:[#allocation2] sm:$0xff]
    %v22 = vld [vmem:[#allocation2 + $0x8] sm:$0xff]
    %v23 = vmax.f32 %v21, 0.0
    %v24 = vmax.f32 %v22, 0.0
    %25 = vst [vmem:[#allocation5] sm:$0xff] %v23
    %26 = vst [vmem:[#allocation5 + $0x8] sm:$0xff] %v24
    // Predicated region
    $region10: #{tpu_custom_call.1} parent=1 // pred_check
      _
    $region11: #{tpu_custom_call.1} parent=1 // pred_check_branch
      %28 = sbr.rel (0) target = $region13
    $region12: #{tpu_custom_call.1} parent=1 // pred_region
      %s30 = ssub.s32 256, 256
      %31 = vsyncadd [#allocation4], %s30
      %s33 = sshll.u32 [#allocation5], 4
      %s34 = int_to_ptr.vmem [resolvable:$true] %s33
      %36 = dma.vmem_to_hbm [thread:$0]  %s34, 256, %s1, [#allocation4]
    $region13: #{tpu_custom_call.1} parent=1 // pred_fallthru
      _
    // Predicated region
    $region14: #{tpu_custom_call.1} parent=1 // pred_check
      _
    $region15: #{tpu_custom_call.1} parent=1 // pred_check_branch
      %38 = sbr.rel (0) target = $region17
    $region16: #{tpu_custom_call.1} parent=1 // pred_region
      %39 = dma.done [#allocation4], 256
    $region17: #{tpu_custom_call.1} parent=1 // pred_fallthru
      _
    %40 = vsyncpa [#allocation3], 1
    %41 = vsyncpa [#allocation4], 1

</llo_original>
